<compile_context>
chip_gen: v7x
topology: tpu7x:2x2x1
jax: 0.10.0
libtpu: 0.0.40
codegen_flags: <defaults>
</compile_context>

<pallas_src>
import jax
import jax.numpy as jnp
from jax.experimental import pallas as pl
from jax.experimental.pallas import tpu as pltpu


def _egcn_apply_kernel(x_ref, w1_ref, b1_ref, w2_ref, b2_ref, w3_ref, b3_ref,
                       o_ref):
    x = x_ref[...]                                                  # [tr, P*F]
    # Layer 1 + ReLU (MLP.l1)
    h1 = jnp.dot(x, w1_ref[...],
                 preferred_element_type=jnp.float32) + b1_ref[...]
    h1 = jnp.maximum(h1, 0.0)                                       # [tr, P*F/2]
    # Layer 2 (MLP.l2) + outer ReLU
    h2 = jnp.dot(h1, w2_ref[...],
                 preferred_element_type=jnp.float32) + b2_ref[...]
    h2 = jnp.maximum(h2, 0.0)                                       # [tr, P*F/4]
    # Final linear -> one scalar per packed edge
    out = jnp.dot(h2, w3_ref[...],
                  preferred_element_type=jnp.float32) + b3_ref[...]
    o_ref[...] = out.astype(o_ref.dtype)                            # [tr, P]


def _round_up(x, m):
    return ((x + m - 1) // m) * m


def _choose_pack(n_edges, in_feats, max_weight_bytes=4 << 20):
    """Largest P in {8,4,2,1} dividing N with block-diag weights kept small."""
    hid, qrt = in_feats // 2, in_feats // 4
    for p in (8, 4, 2, 1):
        if n_edges % p:
            continue
        w_bytes = 4 * p * p * (in_feats * hid + hid * qrt + qrt)
        if w_bytes <= max_weight_bytes:
            return p
    return 1


def _choose_tile_rows(rows, requested):
    tr = max(8, min(_round_up(requested, 8), _round_up(rows, 8)))
    # Keep at least two grid steps when there is enough work so the parallel
    # grid axis can shard across both v7x TensorCores.
    if _round_up(rows, 8) >= 16 and pl.cdiv(rows, tr) < 2:
        tr = _round_up(pl.cdiv(rows, 2), 8)
    return tr


def egcn_apply(m, params, *, tile_rows=1024):
    """Fused Linear->ReLU->Linear->ReLU->Linear over edge features.

    m:      [N, in_feats] float32 edge features.
    params: (w1 [F/2,F], b1 [F/2], w2 [F/4,F/2], b2 [F/4], w3 [1,F/4], b3 [1])
            torch-native nn.Linear layout.
    returns [N, 1]
    """
    w1, b1, w2, b2, w3, b3 = params
    N, F = m.shape
    hid, qrt = w1.shape[0], w2.shape[0]
    dt = m.dtype

    P = _choose_pack(N, F)
    R = N // P
    tr = _choose_tile_rows(R, tile_rows)
    grid = (pl.cdiv(R, tr),)

    # Pack P edges per row: pure row-major reshape, no data movement.
    xp = m.reshape(R, P * F)

    # Block-diagonal weights apply each layer to the P packed edges at once.
    eye_p = jnp.eye(P, dtype=dt)
    w1p = jnp.kron(eye_p, w1.T.astype(dt))                    # [P*F,   P*hid]
    w2p = jnp.kron(eye_p, w2.T.astype(dt))                    # [P*hid, P*qrt]
    w3p = jnp.kron(eye_p, w3.T.astype(dt))                    # [P*qrt, P]
    b1p = jnp.tile(b1.reshape(1, hid).astype(dt), (1, P))     # [1, P*hid]
    b2p = jnp.tile(b2.reshape(1, qrt).astype(dt), (1, P))     # [1, P*qrt]
    b3p = jnp.tile(b3.reshape(1, 1).astype(dt), (1, P))       # [1, P]

    full = lambda shape: pl.BlockSpec(shape, lambda i: tuple(0 for _ in shape))

    out_p = pl.pallas_call(
        _egcn_apply_kernel,
        out_shape=jax.ShapeDtypeStruct((R, P), dt),
        grid_spec=pltpu.PrefetchScalarGridSpec(
            num_scalar_prefetch=0,
            grid=grid,
            in_specs=[
                pl.BlockSpec((tr, P * F), lambda i: (i, 0)),  # packed edges
                full((P * F, P * hid)),     # W1 block-diag
                full((1, P * hid)),         # b1
                full((P * hid, P * qrt)),   # W2 block-diag
                full((1, P * qrt)),         # b2
                full((P * qrt, P)),         # W3 block-diag
                full((1, P)),               # b3
            ],
            out_specs=pl.BlockSpec((tr, P), lambda i: (i, 0)),
        ),
        compiler_params=pltpu.CompilerParams(
            dimension_semantics=("parallel",)),
    )(xp, w1p, b1p, w2p, b2p, w3p, b3p)

    # [R, P] -> [N, 1]: identical row-major element order, free reshape.
    return out_p.reshape(N, 1)


def init_params(key, in_feats, dtype=jnp.float32):
    """nn.Linear-style init (U[-1/sqrt(fan_in), 1/sqrt(fan_in)]), torch layout."""
    hid, qrt = in_feats // 2, in_feats // 4
    ks = jax.random.split(key, 6)

    def lin(kw, kb, fan_in, fan_out):
        bound = float(fan_in) ** -0.5
        w = jax.random.uniform(kw, (fan_out, fan_in), dtype, -bound, bound)
        b = jax.random.uniform(kb, (fan_out,), dtype, -bound, bound)
        return w, b

    w1, b1 = lin(ks[0], ks[1], in_feats, hid)
    w2, b2 = lin(ks[2], ks[3], hid, qrt)
    w3, b3 = lin(ks[4], ks[5], qrt, 1)
    return (w1, b1, w2, b2, w3, b3)


def egcn_apply_ref(m, params):
    w1, b1, w2, b2, w3, b3 = params
    h1 = jnp.maximum(m @ w1.T + b1, 0.0)
    h2 = jnp.maximum(h1 @ w2.T + b2, 0.0)
    return h2 @ w3.T + b3


if __name__ == "__main__":
    in_feats = 32            # -> hidden 16, quarter 8, final 1

    key = jax.random.PRNGKey(0)
    k_m, k_p, k_m2 = jax.random.split(key, 3)
    params = init_params(k_p, in_feats)

    # Case 1: N divisible by 8 -> packed (P=8) lane-dense path, 2 grid steps,
    # ragged last block (250 packed rows, tile of 128).
    n_edges = 2000
    m = jax.random.normal(k_m, (n_edges, in_feats), jnp.float32)
    out = jax.block_until_ready(egcn_apply(m, params))
    ref = egcn_apply_ref(m, params)
    assert out.shape == (n_edges, 1)
    assert jnp.allclose(out, ref, atol=1e-4, rtol=1e-4), \
        float(jnp.max(jnp.abs(out - ref)))

    # Case 2: odd N -> P=1 fallback path (still a single fused kernel).
    n_edges2 = 1001
    m2 = jax.random.normal(k_m2, (n_edges2, in_feats), jnp.float32)
    out2 = jax.block_until_ready(egcn_apply(m2, params))
    ref2 = egcn_apply_ref(m2, params)
    assert out2.shape == (n_edges2, 1)
    assert jnp.allclose(out2, ref2, atol=1e-4, rtol=1e-4), \
        float(jnp.max(jnp.abs(out2 - ref2)))

    print("KERNEL_OK")
</pallas_src>

<mosaic_0001>
module attributes {stable_mosaic.version = 11 : i64} {
  func.func @_egcn_apply_kernel(%arg0: i32, %arg1: memref<128x256xf32, #tpu.memory_space<vmem>>, %arg2: memref<256x128xf32, #tpu.memory_space<vmem>>, %arg3: memref<1x128xf32, #tpu.memory_space<vmem>>, %arg4: memref<128x64xf32, #tpu.memory_space<vmem>>, %arg5: memref<1x64xf32, #tpu.memory_space<vmem>>, %arg6: memref<64x8xf32, #tpu.memory_space<vmem>>, %arg7: memref<1x8xf32, #tpu.memory_space<vmem>>, %arg8: memref<128x8xf32, #tpu.memory_space<vmem>>) attributes {dimension_semantics = [#tpu.dimension_semantics<parallel>], iteration_bounds = array<i64: 2>, scalar_prefetch = 0 : i64, scratch_operands = 0 : i64, tpu.core_type = #tpu.core_type<tc>, window_params = [{transform_indices = @transform_0, window_bounds = array<i64: 128, 256>}, {pipeline_mode = #tpu.pipeline_mode<synchronous>, transform_indices = @transform_1, window_bounds = array<i64: 256, 128>}, {pipeline_mode = #tpu.pipeline_mode<synchronous>, transform_indices = @transform_2, window_bounds = array<i64: 1, 128>}, {pipeline_mode = #tpu.pipeline_mode<synchronous>, transform_indices = @transform_3, window_bounds = array<i64: 128, 64>}, {pipeline_mode = #tpu.pipeline_mode<synchronous>, transform_indices = @transform_4, window_bounds = array<i64: 1, 64>}, {pipeline_mode = #tpu.pipeline_mode<synchronous>, transform_indices = @transform_5, window_bounds = array<i64: 64, 8>}, {pipeline_mode = #tpu.pipeline_mode<synchronous>, transform_indices = @transform_6, window_bounds = array<i64: 1, 8>}, {transform_indices = @transform_7, window_bounds = array<i64: 128, 8>}]} {
    %c0 = arith.constant 0 : index
    %c0_0 = arith.constant 0 : index
    %0 = vector.load %arg1[%c0, %c0_0] : memref<128x256xf32, #tpu.memory_space<vmem>>, vector<128x256xf32>
    %c0_1 = arith.constant 0 : index
    %c0_2 = arith.constant 0 : index
    %1 = vector.load %arg2[%c0_1, %c0_2] : memref<256x128xf32, #tpu.memory_space<vmem>>, vector<256x128xf32>
    %cst = arith.constant dense<0.000000e+00> : vector<128x128xf32>
    %2 = tpu.matmul %0, %1, %cst {dimension_numbers = #tpu.dot_dimension_numbers<[1], [0], [0], [1], [0, 0, 1, 1], [], []>} : vector<128x256xf32>, vector<256x128xf32>, vector<128x128xf32> -> vector<128x128xf32>
    %c0_3 = arith.constant 0 : index
    %c0_4 = arith.constant 0 : index
    %3 = vector.load %arg3[%c0_3, %c0_4] : memref<1x128xf32, #tpu.memory_space<vmem>>, vector<1x128xf32>
    %4 = vector.broadcast %3 : vector<1x128xf32> to vector<128x128xf32>
    %5 = arith.addf %2, %4 : vector<128x128xf32>
    %cst_5 = arith.constant 0.000000e+00 : f32
    %6 = vector.broadcast %cst_5 : f32 to vector<128x128xf32>
    %7 = arith.maximumf %5, %6 : vector<128x128xf32>
    %c0_6 = arith.constant 0 : index
    %c0_7 = arith.constant 0 : index
    %8 = vector.load %arg4[%c0_6, %c0_7] : memref<128x64xf32, #tpu.memory_space<vmem>>, vector<128x64xf32>
    %cst_8 = arith.constant dense<0.000000e+00> : vector<128x64xf32>
    %9 = tpu.matmul %7, %8, %cst_8 {dimension_numbers = #tpu.dot_dimension_numbers<[1], [0], [0], [1], [0, 0, 1, 1], [], []>} : vector<128x128xf32>, vector<128x64xf32>, vector<128x64xf32> -> vector<128x64xf32>
    %c0_9 = arith.constant 0 : index
    %c0_10 = arith.constant 0 : index
    %10 = vector.load %arg5[%c0_9, %c0_10] : memref<1x64xf32, #tpu.memory_space<vmem>>, vector<1x64xf32>
    %11 = vector.broadcast %10 : vector<1x64xf32> to vector<128x64xf32>
    %12 = arith.addf %9, %11 : vector<128x64xf32>
    %cst_11 = arith.constant 0.000000e+00 : f32
    %13 = vector.broadcast %cst_11 : f32 to vector<128x64xf32>
    %14 = arith.maximumf %12, %13 : vector<128x64xf32>
    %c0_12 = arith.constant 0 : index
    %c0_13 = arith.constant 0 : index
    %15 = vector.load %arg6[%c0_12, %c0_13] : memref<64x8xf32, #tpu.memory_space<vmem>>, vector<64x8xf32>
    %cst_14 = arith.constant dense<0.000000e+00> : vector<128x8xf32>
    %16 = tpu.matmul %14, %15, %cst_14 {dimension_numbers = #tpu.dot_dimension_numbers<[1], [0], [0], [1], [0, 0, 1, 1], [], []>} : vector<128x64xf32>, vector<64x8xf32>, vector<128x8xf32> -> vector<128x8xf32>
    %c0_15 = arith.constant 0 : index
    %c0_16 = arith.constant 0 : index
    %17 = vector.load %arg7[%c0_15, %c0_16] : memref<1x8xf32, #tpu.memory_space<vmem>>, vector<1x8xf32>
    %18 = vector.broadcast %17 : vector<1x8xf32> to vector<128x8xf32>
    %19 = arith.addf %16, %18 : vector<128x8xf32>
    %c0_17 = arith.constant 0 : index
    %c0_18 = arith.constant 0 : index
    %20 = vector.load %arg8[%c0_17, %c0_18] : memref<128x8xf32, #tpu.memory_space<vmem>>, vector<128x8xf32>
    tpu.vector_store %arg8[%c0_17, %c0_18], %19 {strides = array<i32>} : memref<128x8xf32, #tpu.memory_space<vmem>>, vector<128x8xf32>,
    return
  }
  func.func @transform_0(%arg0: i32) -> (i32, i32) {
    %c0_i32 = arith.constant 0 : i32
    %c0_i32_0 = arith.constant 0 : i32
    return %arg0, %c0_i32 : i32, i32
  }
  func.func @transform_1(%arg0: i32) -> (i32, i32) {
    %c0_i32 = arith.constant 0 : i32
    %c0_i32_0 = arith.constant 0 : i32
    %c0_i32_1 = arith.constant 0 : i32
    return %c0_i32, %c0_i32_0 : i32, i32
  }
  func.func @transform_2(%arg0: i32) -> (i32, i32) {
    %c0_i32 = arith.constant 0 : i32
    %c0_i32_0 = arith.constant 0 : i32
    %c0_i32_1 = arith.constant 0 : i32
    return %c0_i32, %c0_i32_0 : i32, i32
  }
  func.func @transform_3(%arg0: i32) -> (i32, i32) {
    %c0_i32 = arith.constant 0 : i32
    %c0_i32_0 = arith.constant 0 : i32
    %c0_i32_1 = arith.constant 0 : i32
    return %c0_i32, %c0_i32_0 : i32, i32
  }
  func.func @transform_4(%arg0: i32) -> (i32, i32) {
    %c0_i32 = arith.constant 0 : i32
    %c0_i32_0 = arith.constant 0 : i32
    %c0_i32_1 = arith.constant 0 : i32
    return %c0_i32, %c0_i32_0 : i32, i32
  }
  func.func @transform_5(%arg0: i32) -> (i32, i32) {
    %c0_i32 = arith.constant 0 : i32
    %c0_i32_0 = arith.constant 0 : i32
    %c0_i32_1 = arith.constant 0 : i32
    return %c0_i32, %c0_i32_0 : i32, i32
  }
  func.func @transform_6(%arg0: i32) -> (i32, i32) {
    %c0_i32 = arith.constant 0 : i32
    %c0_i32_0 = arith.constant 0 : i32
    %c0_i32_1 = arith.constant 0 : i32
    return %c0_i32, %c0_i32_0 : i32, i32
  }
  func.func @transform_7(%arg0: i32) -> (i32, i32) {
    %c0_i32 = arith.constant 0 : i32
    %c0_i32_0 = arith.constant 0 : i32
    return %arg0, %c0_i32 : i32, i32
  }
}

</mosaic_0001>

<llo_original>
// kernel: tpu_custom_call.1
$region0: #{tpu_custom_call.1}
  #allocation0 [shape = 'u32[]', space=smem, size = 0x4, offset = 0x4, fixed_abs, tag = 'smem constant byte address 0x4 - core index']
  #allocation1 [shape = 'u32[144,128]{1,0:T(1,128)}', space=vmem, size = 0x12000, scoped, tag = 'internal scratch']
  %s0 = inlined_call_operand.hbm [shape: f32[250,256], index: 0, kind: input, shape index: {}]
  %s1 = inlined_call_operand.vmem [shape: f32[256,128], index: 1, kind: input, shape index: {}]
  %s2 = inlined_call_operand.vmem [shape: f32[1,128], index: 2, kind: input, shape index: {}]
  %s3 = inlined_call_operand.vmem [shape: f32[128,64], index: 3, kind: input, shape index: {}]
  %s4 = inlined_call_operand.vmem [shape: f32[1,64], index: 4, kind: input, shape index: {}]
  %s5 = inlined_call_operand.vmem [shape: f32[64,8], index: 5, kind: input, shape index: {}]
  %s6 = inlined_call_operand.vmem [shape: f32[1,8], index: 6, kind: input, shape index: {}]
  %s7 = inlined_call_operand.vmem [shape: f32[250,8], index: 7, kind: output, shape index: {}]
  %s8 = sld [smem:[#allocation0]]
  $region65: #{tpu_custom_call.1} parent=0
    _
  %s10 = ssub.s32 1, %s8
  %s11 = scalar_select 0, %s10, %s8
  $region1: #{tpu_custom_call.1} parent=0
    #allocation2 [shape = 'u8[262144]{0}', space=vmem, size = 0x40000, scoped, tag = 'input window, operand 0']
    #allocation3 [shape = 's32[2]{0}', space=sflag, size = 0x8, scoped, tag = 'scoped memory for tpu_custom_call.1']
    %12 = vsyncpa [#allocation3], 0
    %s13 = scalar_lea.sflag [#allocation3], 1
    %14 = vsyncpa %s13, 0
    loop: start=0, step=1, limit=4
    $region2: #{tpu_custom_call.1} parent=1 // loop_pre_header
      _
    $region3: #{tpu_custom_call.1} parent=1 // loop_header
      %s16 = sphi 0, %s20
      %p17 = scmp.ge.s32.totalorder %s16, 4
      %s26 = sphi 0, %s28
      %s29 = sphi 0, %s26
      %s30 = sphi 0, %s29
      %s46 = sphi 0, %s30
      %s50 = sphi 0, %s50
      %s52 = sphi 0, %s50
      %s53 = sphi 0, %s52
      %s67 = sphi 0, %s53
      %s71 = sphi 0, %s71
      %s73 = sphi 0, %s71
      %s74 = sphi 0, %s73
      %s88 = sphi 0, %s74
      %s92 = sphi 0, %s92
      %s94 = sphi 0, %s92
      %s95 = sphi 0, %s94
      %s109 = sphi 0, %s95
      %s113 = sphi 0, %s113
      %s115 = sphi 0, %s113
      %s116 = sphi 0, %s115
      %s130 = sphi 0, %s116
      %s134 = sphi 0, %s134
      %s136 = sphi 0, %s134
      %s137 = sphi 0, %s136
      %s151 = sphi 0, %s137
      %s155 = sphi 0, %s155
      %s157 = sphi 0, %s155
      %s158 = sphi 0, %s157
      %s172 = sphi 0, %s158
      %s178 = sphi 0, %s180
      %s181 = sphi 0, %s178
      %s182 = sphi 0, %s181
      %s198 = sphi 0, %s182
    $region4: #{tpu_custom_call.1} parent=1 // loop_header_branch
      %19 = sbr.rel (%p17) target = $region8
    $region5: #{tpu_custom_call.1} parent=1 // loop_body
      %s21 = ssub.s32 %s16, 1
      %s22 = ssub.s32 %s16, 2
      %s23 = sadd.s32 %s16, 1
      %s24 = ssub.s32 %s16, %s23
      %p25 = scmp.eq.s32.totalorder %s24, 0
      %s27 = sadd.s32 %s26, 1
      %s28 = scalar_select %p25, %s26, %s27
      %p31 = pneg %p25
      %p32 = scmp.eq.s32.totalorder %s16, 1
      %p33 = por %p31, %p32
      %p34 = scmp.ne.s32.totalorder %s26, %s29
      %p35 = scmp.eq.s32.totalorder %s16, 0
      %p36 = por %p34, %p35
      %p37 = scmp.ne.s32.totalorder %s26, %s29
      %p38 = scmp.eq.s32.totalorder %s21, 1
      %p39 = por %p37, %p38
      %p40 = scmp.ne.s32.totalorder %s29, %s30
      %p41 = scmp.eq.s32.totalorder %s21, 0
      %p42 = por %p40, %p41
      %p43 = scmp.ne.s32.totalorder %s29, %s30
      %p44 = scmp.eq.s32.totalorder %s22, 1
      %p45 = por %p43, %p44
      %p47 = scmp.ne.s32.totalorder %s30, %s46
      %p48 = scmp.eq.s32.totalorder %s22, 0
      %p49 = por %p47, %p48
      %s51 = sadd.s32 %s50, 1
      %p54 = scmp.eq.s32.totalorder %s16, 1
      %p55 = scmp.ne.s32.totalorder %s50, %s52
      %p56 = scmp.eq.s32.totalorder %s16, 0
      %p57 = por %p55, %p56
      %p58 = scmp.ne.s32.totalorder %s50, %s52
      %p59 = scmp.eq.s32.totalorder %s21, 1
      %p60 = por %p58, %p59
      %p61 = scmp.ne.s32.totalorder %s52, %s53
      %p62 = scmp.eq.s32.totalorder %s21, 0
      %p63 = por %p61, %p62
      %p64 = scmp.ne.s32.totalorder %s52, %s53
      %p65 = scmp.eq.s32.totalorder %s22, 1
      %p66 = por %p64, %p65
      %p68 = scmp.ne.s32.totalorder %s53, %s67
      %p69 = scmp.eq.s32.totalorder %s22, 0
      %p70 = por %p68, %p69
      %s72 = sadd.s32 %s71, 1
      %p75 = scmp.eq.s32.totalorder %s16, 1
      %p76 = scmp.ne.s32.totalorder %s71, %s73
      %p77 = scmp.eq.s32.totalorder %s16, 0
      %p78 = por %p76, %p77
      %p79 = scmp.ne.s32.totalorder %s71, %s73
      %p80 = scmp.eq.s32.totalorder %s21, 1
      %p81 = por %p79, %p80
      %p82 = scmp.ne.s32.totalorder %s73, %s74
      %p83 = scmp.eq.s32.totalorder %s21, 0
      %p84 = por %p82, %p83
      %p85 = scmp.ne.s32.totalorder %s73, %s74
      %p86 = scmp.eq.s32.totalorder %s22, 1
      %p87 = por %p85, %p86
      %p89 = scmp.ne.s32.totalorder %s74, %s88
      %p90 = scmp.eq.s32.totalorder %s22, 0
      %p91 = por %p89, %p90
      %s93 = sadd.s32 %s92, 1
      %p96 = scmp.eq.s32.totalorder %s16, 1
      %p97 = scmp.ne.s32.totalorder %s92, %s94
      %p98 = scmp.eq.s32.totalorder %s16, 0
      %p99 = por %p97, %p98
      %p100 = scmp.ne.s32.totalorder %s92, %s94
      %p101 = scmp.eq.s32.totalorder %s21, 1
      %p102 = por %p100, %p101
      %p103 = scmp.ne.s32.totalorder %s94, %s95
      %p104 = scmp.eq.s32.totalorder %s21, 0
      %p105 = por %p103, %p104
      %p106 = scmp.ne.s32.totalorder %s94, %s95
      %p107 = scmp.eq.s32.totalorder %s22, 1
      %p108 = por %p106, %p107
      %p110 = scmp.ne.s32.totalorder %s95, %s109
      %p111 = scmp.eq.s32.totalorder %s22, 0
      %p112 = por %p110, %p111
      %s114 = sadd.s32 %s113, 1
      %p117 = scmp.eq.s32.totalorder %s16, 1
      %p118 = scmp.ne.s32.totalorder %s113, %s115
      %p119 = scmp.eq.s32.totalorder %s16, 0
      %p120 = por %p118, %p119
      %p121 = scmp.ne.s32.totalorder %s113, %s115
      %p122 = scmp.eq.s32.totalorder %s21, 1
      %p123 = por %p121, %p122
      %p124 = scmp.ne.s32.totalorder %s115, %s116
      %p125 = scmp.eq.s32.totalorder %s21, 0
      %p126 = por %p124, %p125
      %p127 = scmp.ne.s32.totalorder %s115, %s116
      %p128 = scmp.eq.s32.totalorder %s22, 1
      %p129 = por %p127, %p128
      %p131 = scmp.ne.s32.totalorder %s116, %s130
      %p132 = scmp.eq.s32.totalorder %s22, 0
      %p133 = por %p131, %p132
      %s135 = sadd.s32 %s134, 1
      %p138 = scmp.eq.s32.totalorder %s16, 1
      %p139 = scmp.ne.s32.totalorder %s134, %s136
      %p140 = scmp.eq.s32.totalorder %s16, 0
      %p141 = por %p139, %p140
      %p142 = scmp.ne.s32.totalorder %s134, %s136
      %p143 = scmp.eq.s32.totalorder %s21, 1
      %p144 = por %p142, %p143
      %p145 = scmp.ne.s32.totalorder %s136, %s137
      %p146 = scmp.eq.s32.totalorder %s21, 0
      %p147 = por %p145, %p146
      %p148 = scmp.ne.s32.totalorder %s136, %s137
      %p149 = scmp.eq.s32.totalorder %s22, 1
      %p150 = por %p148, %p149
      %p152 = scmp.ne.s32.totalorder %s137, %s151
      %p153 = scmp.eq.s32.totalorder %s22, 0
      %p154 = por %p152, %p153
      %s156 = sadd.s32 %s155, 1
      %p159 = scmp.eq.s32.totalorder %s16, 1
      %p160 = scmp.ne.s32.totalorder %s155, %s157
      %p161 = scmp.eq.s32.totalorder %s16, 0
      %p162 = por %p160, %p161
      %p163 = scmp.ne.s32.totalorder %s155, %s157
      %p164 = scmp.eq.s32.totalorder %s21, 1
      %p165 = por %p163, %p164
      %p166 = scmp.ne.s32.totalorder %s157, %s158
      %p167 = scmp.eq.s32.totalorder %s21, 0
      %p168 = por %p166, %p167
      %p169 = scmp.ne.s32.totalorder %s157, %s158
      %p170 = scmp.eq.s32.totalorder %s22, 1
      %p171 = por %p169, %p170
      %p173 = scmp.ne.s32.totalorder %s158, %s172
      %p174 = scmp.eq.s32.totalorder %s22, 0
      %p175 = por %p173, %p174
      %s176 = ssub.s32 %s16, %s23
      %p177 = scmp.eq.s32.totalorder %s176, 0
      %s179 = sadd.s32 %s178, 1
      %s180 = scalar_select %p177, %s178, %s179
      %p183 = pneg %p177
      %p184 = scmp.eq.s32.totalorder %s16, 1
      %p185 = por %p183, %p184
      %p186 = scmp.ne.s32.totalorder %s178, %s181
      %p187 = scmp.eq.s32.totalorder %s16, 0
      %p188 = por %p186, %p187
      %p189 = scmp.ne.s32.totalorder %s178, %s181
      %p190 = scmp.eq.s32.totalorder %s21, 1
      %p191 = por %p189, %p190
      %p192 = scmp.ne.s32.totalorder %s181, %s182
      %p193 = scmp.eq.s32.totalorder %s21, 0
      %p194 = por %p192, %p193
      %p195 = scmp.ne.s32.totalorder %s181, %s182
      %p196 = scmp.eq.s32.totalorder %s22, 1
      %p197 = por %p195, %p196
      %p199 = scmp.ne.s32.totalorder %s182, %s198
      %p200 = scmp.eq.s32.totalorder %s22, 0
      %p201 = por %p199, %p200
      %p202 = scmp.le.s32.totalorder 1, %s16
      %p203 = scmp.lt.s32.totalorder %s16, 3
      %p204 = pnand %p202, %p203
      %p205 = pneg %p204
      // Predicated region
      $region9: #{tpu_custom_call.1} parent=5 // pred_check
        _
      $region10: #{tpu_custom_call.1} parent=5 // pred_check_branch
        %207 = sbr.rel (%p204) target = $region12
      $region11: #{tpu_custom_call.1} parent=5 // pred_region
        %s208 = ssub.s32 %s16, 1
        // Predicated region
        $region13: #{tpu_custom_call.1} parent=11 // pred_check
          %p209 = pneg %p63
        $region14: #{tpu_custom_call.1} parent=11 // pred_check_branch
          %211 = sbr.rel (%p209) target = $region16
        $region15: #{tpu_custom_call.1} parent=11 // pred_region
          _
        $region16: #{tpu_custom_call.1} parent=11 // pred_fallthru
          _
        // Predicated region
        $region17: #{tpu_custom_call.1} parent=11 // pred_check
          %p212 = pneg %p84
        $region18: #{tpu_custom_call.1} parent=11 // pred_check_branch
          %214 = sbr.rel (%p212) target = $region20
        $region19: #{tpu_custom_call.1} parent=11 // pred_region
          _
        $region20: #{tpu_custom_call.1} parent=11 // pred_fallthru
          _
        // Predicated region
        $region21: #{tpu_custom_call.1} parent=11 // pred_check
          %p215 = pneg %p105
        $region22: #{tpu_custom_call.1} parent=11 // pred_check_branch
          %217 = sbr.rel (%p215) target = $region24
        $region23: #{tpu_custom_call.1} parent=11 // pred_region
          _
        $region24: #{tpu_custom_call.1} parent=11 // pred_fallthru
          _
        // Predicated region
        $region25: #{tpu_custom_call.1} parent=11 // pred_check
          %p218 = pneg %p126
        $region26: #{tpu_custom_call.1} parent=11 // pred_check_branch
          %220 = sbr.rel (%p218) target = $region28
        $region27: #{tpu_custom_call.1} parent=11 // pred_region
          _
        $region28: #{tpu_custom_call.1} parent=11 // pred_fallthru
          _
        // Predicated region
        $region29: #{tpu_custom_call.1} parent=11 // pred_check
          %p221 = pneg %p147
        $region30: #{tpu_custom_call.1} parent=11 // pred_check_branch
          %223 = sbr.rel (%p221) target = $region32
        $region31: #{tpu_custom_call.1} parent=11 // pred_region
          _
        $region32: #{tpu_custom_call.1} parent=11 // pred_fallthru
          _
        // Predicated region
        $region33: #{tpu_custom_call.1} parent=11 // pred_check
          %p224 = pneg %p168
        $region34: #{tpu_custom_call.1} parent=11 // pred_check_branch
          %226 = sbr.rel (%p224) target = $region36
        $region35: #{tpu_custom_call.1} parent=11 // pred_region
          _
        $region36: #{tpu_custom_call.1} parent=11 // pred_fallthru
          _
      $region12: #{tpu_custom_call.1} parent=5 // pred_fallthru
        _
      %p227 = scmp.lt.s32.totalorder %s16, 2
      // Predicated region
      $region37: #{tpu_custom_call.1} parent=5 // pred_check
        %p228 = pneg %p227
      $region38: #{tpu_custom_call.1} parent=5 // pred_check_branch
        %230 = sbr.rel (%p228) target = $region40
      $region39: #{tpu_custom_call.1} parent=5 // pred_region
        // Predicated region
        $region41: #{tpu_custom_call.1} parent=39 // pred_check
          %p231 = pneg %p36
        $region42: #{tpu_custom_call.1} parent=39 // pred_check_branch
          %233 = sbr.rel (%p231) target = $region44
        $region43: #{tpu_custom_call.1} parent=39 // pred_region
          %s234 = sand.u32 %s26, 1
          %s235 = scalar_lea.sflag [#allocation3], %s234
          %s236 = sand.u32 %s26, 1
          %s237 = smul.addr %s236, 256
          %s238 = scalar_lea.vmem [#allocation2], %s237
          %s239 = smul.u32 16, %s16
          %s241 = ssub.s32 4096, 4096
          %242 = vsyncadd %s235, %s241
          %s243 = smul.addr %s239, 2
          %s244 = smul.addr %s243, 128
          %s245 = scalar_lea.hbm %s0, %s244
          %s246 = sshll.u32 %s238, 4
          %s247 = int_to_ptr.vmem [resolvable:$true] %s246
          %252 = dma.hbm_to_vmem [thread:$0]  %s245, 4096, %s247, %s235, 256, 256, 16
        $region44: #{tpu_custom_call.1} parent=39 // pred_fallthru
          _
      $region40: #{tpu_custom_call.1} parent=5 // pred_fallthru
        _
      %p253 = scmp.le.s32.totalorder 1, %s16
      %p254 = scmp.lt.s32.totalorder %s16, 3
      %p255 = pnand %p253, %p254
      %p256 = pneg %p255
      // Predicated region
      $region45: #{tpu_custom_call.1} parent=5 // pred_check
        _
      $region46: #{tpu_custom_call.1} parent=5 // pred_check_branch
        %258 = sbr.rel (%p255) target = $region48
      $region47: #{tpu_custom_call.1} parent=5 // pred_region
        %s259 = ssub.s32 %s16, 1
        %s260 = sand.u32 %s29, 1
        %s261 = scalar_lea.sflag [#allocation3], %s260
        %s262 = sand.u32 %s29, 1
        %s263 = smul.addr %s262, 256
        %s264 = scalar_lea.vmem [#allocation2], %s263
        // Predicated region
        $region49: #{tpu_custom_call.1} parent=47 // pred_check
          %p265 = pneg %p42
        $region50: #{tpu_custom_call.1} parent=47 // pred_check_branch
          %267 = sbr.rel (%p265) target = $region52
        $region51: #{tpu_custom_call.1} parent=47 // pred_region
          %268 = dma.done %s261, 4096
        $region52: #{tpu_custom_call.1} parent=47 // pred_fallthru
          _
        %s269 = sand.u32 %s29, 1
        %s270 = scalar_lea.sflag [#allocation3], %s269
        %s271 = sand.u32 %s29, 1
        %s272 = smul.addr %s271, 256
        %s273 = scalar_lea.vmem [#allocation2], %s272
        %p274 = pneg %p42
        %p275 = pneg %p39
        %p276 = pneg %p63
        %p277 = pneg %p60
        %p278 = pneg %p84
        %p279 = pneg %p81
        %p280 = pneg %p105
        %p281 = pneg %p102
        %p282 = pneg %p126
        %p283 = pneg %p123
        %p284 = pneg %p147
        %p285 = pneg %p144
        %p286 = pneg %p168
        %p287 = pneg %p165
        %p288 = pneg %p194
        %p289 = pneg %p191
        %s290 = smul.u32 16, %s21
        %p291 = scmp.lt.s32.totalorder %s290, 31
        %s292 = scalar_select %p291, %s290, 31
        %s293 = smul.addr %s292, 8
        %s294 = scalar_lea.vmem %s7, %s293
        %s295 = smul.u32 16, %s21
        %s296 = smul.u32 16, %s21
        %p297 = scmp.lt.s32.totalorder %s296, 31
        %s298 = scalar_select %p297, %s296, 31
        %s299 = smul.addr %s298, 8
        %s300 = scalar_lea.vmem %s7, %s299
        %s301 = smul.u32 16, %s21
        %v302 = vld [vmem:[%s264] sm:$0xff]
        %v303 = vld [vmem:[%s264 + $0x8] sm:$0xff]
        %v304 = vld [vmem:[%s264 + $0x10] sm:$0xff]
        %v305 = vld [vmem:[%s264 + $0x18] sm:$0xff]
        %v306 = vld [vmem:[%s264 + $0x20] sm:$0xff]
        %v307 = vld [vmem:[%s264 + $0x28] sm:$0xff]
        %v308 = vld [vmem:[%s264 + $0x30] sm:$0xff]
        %v309 = vld [vmem:[%s264 + $0x38] sm:$0xff]
        %v310 = vld [vmem:[%s264 + $0x40] sm:$0xff]
        %v311 = vld [vmem:[%s264 + $0x48] sm:$0xff]
        %v312 = vld [vmem:[%s264 + $0x50] sm:$0xff]
        %v313 = vld [vmem:[%s264 + $0x58] sm:$0xff]
        %v314 = vld [vmem:[%s264 + $0x60] sm:$0xff]
        %v315 = vld [vmem:[%s264 + $0x68] sm:$0xff]
        %v316 = vld [vmem:[%s264 + $0x70] sm:$0xff]
        %v317 = vld [vmem:[%s264 + $0x78] sm:$0xff]
        %v318 = vld [vmem:[%s264 + $0x80] sm:$0xff]
        %v319 = vld [vmem:[%s264 + $0x88] sm:$0xff]
        %v320 = vld [vmem:[%s264 + $0x90] sm:$0xff]
        %v321 = vld [vmem:[%s264 + $0x98] sm:$0xff]
        %v322 = vld [vmem:[%s264 + $0xa0] sm:$0xff]
        %v323 = vld [vmem:[%s264 + $0xa8] sm:$0xff]
        %v324 = vld [vmem:[%s264 + $0xb0] sm:$0xff]
        %v325 = vld [vmem:[%s264 + $0xb8] sm:$0xff]
        %v326 = vld [vmem:[%s264 + $0xc0] sm:$0xff]
        %v327 = vld [vmem:[%s264 + $0xc8] sm:$0xff]
        %v328 = vld [vmem:[%s264 + $0xd0] sm:$0xff]
        %v329 = vld [vmem:[%s264 + $0xd8] sm:$0xff]
        %v330 = vld [vmem:[%s264 + $0xe0] sm:$0xff]
        %v331 = vld [vmem:[%s264 + $0xe8] sm:$0xff]
        %v332 = vld [vmem:[%s264 + $0xf0] sm:$0xff]
        %v333 = vld [vmem:[%s264 + $0xf8] sm:$0xff]
        %v334 = vld [vmem:[%s1] sm:$0xff]
        %v335 = vld [vmem:[%s1 + $0x8] sm:$0xff]
        %v336 = vld [vmem:[%s1 + $0x10] sm:$0xff]
        %v337 = vld [vmem:[%s1 + $0x18] sm:$0xff]
        %v338 = vld [vmem:[%s1 + $0x20] sm:$0xff]
        %v339 = vld [vmem:[%s1 + $0x28] sm:$0xff]
        %v340 = vld [vmem:[%s1 + $0x30] sm:$0xff]
        %v341 = vld [vmem:[%s1 + $0x38] sm:$0xff]
        %v342 = vld [vmem:[%s1 + $0x40] sm:$0xff]
        %v343 = vld [vmem:[%s1 + $0x48] sm:$0xff]
        %v344 = vld [vmem:[%s1 + $0x50] sm:$0xff]
        %v345 = vld [vmem:[%s1 + $0x58] sm:$0xff]
        %v346 = vld [vmem:[%s1 + $0x60] sm:$0xff]
        %v347 = vld [vmem:[%s1 + $0x68] sm:$0xff]
        %v348 = vld [vmem:[%s1 + $0x70] sm:$0xff]
        %v349 = vld [vmem:[%s1 + $0x78] sm:$0xff]
        %v350 = vld [vmem:[%s1 + $0x80] sm:$0xff]
        %v351 = vld [vmem:[%s1 + $0x88] sm:$0xff]
        %v352 = vld [vmem:[%s1 + $0x90] sm:$0xff]
        %v353 = vld [vmem:[%s1 + $0x98] sm:$0xff]
        %v354 = vld [vmem:[%s1 + $0xa0] sm:$0xff]
        %v355 = vld [vmem:[%s1 + $0xa8] sm:$0xff]
        %v356 = vld [vmem:[%s1 + $0xb0] sm:$0xff]
        %v357 = vld [vmem:[%s1 + $0xb8] sm:$0xff]
        %v358 = vld [vmem:[%s1 + $0xc0] sm:$0xff]
        %v359 = vld [vmem:[%s1 + $0xc8] sm:$0xff]
        %v360 = vld [vmem:[%s1 + $0xd0] sm:$0xff]
        %v361 = vld [vmem:[%s1 + $0xd8] sm:$0xff]
        %v362 = vld [vmem:[%s1 + $0xe0] sm:$0xff]
        %v363 = vld [vmem:[%s1 + $0xe8] sm:$0xff]
        %v364 = vld [vmem:[%s1 + $0xf0] sm:$0xff]
        %v365 = vld [vmem:[%s1 + $0xf8] sm:$0xff]
        %v366 = vld [vmem:[%s2] sm:$0x1]
        %v368 = vlaneseq
        %v369 = vshrl.u32 %v368, 7
        %v370 = vsub.s32 0, %v369
        %v371 = vrot.slane %v366, %v370
        %373 = vmatprep.subr.mxu0 0.0
        %374 = vmatpush1.msra.mxu0 %v334
        %375 = vmatprep.subr.mxu0 0.0
        %376 = vmatpush1.msra.mxu0 %v335
        %377 = vmatprep.subr.mxu0 0.0
        %378 = vmatpush1.msra.mxu0 %v336
        %379 = vmatprep.subr.mxu0 0.0
        %380 = vmatpush1.msra.mxu0 %v337
        %381 = vmatprep.subr.mxu0 0.0
        %382 = vmatpush1.msra.mxu0 %v338
        %383 = vmatprep.subr.mxu0 0.0
        %384 = vmatpush1.msra.mxu0 %v339
        %385 = vmatprep.subr.mxu0 0.0
        %386 = vmatpush1.msra.mxu0 %v340
        %387 = vmatprep.subr.mxu0 0.0
        %388 = vmatpush1.msra.mxu0 %v341
        %389 = vmatprep.subr.mxu0 0.0
        %390 = vmatpush1.msra.mxu0 %v342
        %391 = vmatprep.subr.mxu0 0.0
        %392 = vmatpush1.msra.mxu0 %v343
        %393 = vmatprep.subr.mxu0 0.0
        %394 = vmatpush1.msra.mxu0 %v344
        %395 = vmatprep.subr.mxu0 0.0
        %396 = vmatpush1.msra.mxu0 %v345
        %397 = vmatprep.subr.mxu0 0.0
        %398 = vmatpush1.msra.mxu0 %v346
        %399 = vmatprep.subr.mxu0 0.0
        %400 = vmatpush1.msra.mxu0 %v347
        %401 = vmatprep.subr.mxu0 0.0
        %402 = vmatpush1.msra.mxu0 %v348
        %403 = vmatprep.subr.mxu0 0.0
        %404 = vmatpush1.msra.mxu0 %v349
        %405 = vmatprep.subr.mxu0 0.0
        %406 = vmatpush1.msra.mxu0 %v350
        %407 = vmatprep.subr.mxu0 0.0
        %408 = vmatpush1.msra.mxu0 %v351
        %409 = vmatprep.subr.mxu0 0.0
        %410 = vmatpush1.msra.mxu0 %v352
        %411 = vmatprep.subr.mxu0 0.0
        %412 = vmatpush1.msra.mxu0 %v353
        %413 = vmatprep.subr.mxu0 0.0
        %414 = vmatpush1.msra.mxu0 %v354
        %415 = vmatprep.subr.mxu0 0.0
        %416 = vmatpush1.msra.mxu0 %v355
        %417 = vmatprep.subr.mxu0 0.0
        %418 = vmatpush1.msra.mxu0 %v356
        %419 = vmatprep.subr.mxu0 0.0
        %420 = vmatpush1.msra.mxu0 %v357
        %421 = vmatprep.subr.mxu0 0.0
        %422 = vmatpush1.msra.mxu0 %v358
        %423 = vmatprep.subr.mxu0 0.0
        %424 = vmatpush1.msra.mxu0 %v359
        %425 = vmatprep.subr.mxu0 0.0
        %426 = vmatpush1.msra.mxu0 %v360
        %427 = vmatprep.subr.mxu0 0.0
        %428 = vmatpush1.msra.mxu0 %v361
        %429 = vmatprep.subr.mxu0 0.0
        %430 = vmatpush1.msra.mxu0 %v362
        %431 = vmatprep.subr.mxu0 0.0
        %432 = vmatpush1.msra.mxu0 %v363
        %433 = vmatprep.subr.mxu0 0.0
        %434 = vmatpush1.msra.mxu0 %v364
        %435 = vmatprep.subr.mxu0 0.0
        %436 = vmatpush1.msra.mxu0 %v365
        %437 = vmatprep.mubr.f32.mxu0 %v303
        %438 = vmatmul.mubr.f32.gmra.mrb[0].mxu0 %v302
        %v439 = vpop.f32.mrb[0].mxu0
        %v440 = vadd.f32 %v371, %v439
        %v441 = vpop.f32.mrb[0].mxu0
        %442 = vmatprep.mubr.f32.mxu0 %v305
        %443 = vmatmul.mubr.f32.gmra.mrb[0].mxu0 %v304
        %v444 = vpop.f32.mrb[0].mxu0
        %v445 = vadd.f32 %v371, %v444
        %v446 = vpop.f32.mrb[0].mxu0
        %447 = vmatprep.mubr.f32.mxu0 %v307
        %448 = vmatmul.mubr.f32.gmra.mrb[0].mxu0 %v306
        %v449 = vpop.f32.mrb[0].mxu0
        %v450 = vadd.f32 %v371, %v449
        %v451 = vpop.f32.mrb[0].mxu0
        %452 = vmatprep.mubr.f32.mxu0 %v309
        %453 = vmatmul.mubr.f32.gmra.mrb[0].mxu0 %v308
        %v454 = vpop.f32.mrb[0].mxu0
        %v455 = vadd.f32 %v371, %v454
        %v456 = vpop.f32.mrb[0].mxu0
        %457 = vmatprep.mubr.f32.mxu0 %v311
        %458 = vmatmul.mubr.f32.gmra.mrb[0].mxu0 %v310
        %v459 = vpop.f32.mrb[0].mxu0
        %v460 = vadd.f32 %v371, %v459
        %v461 = vpop.f32.mrb[0].mxu0
        %462 = vmatprep.mubr.f32.mxu0 %v313
        %463 = vmatmul.mubr.f32.gmra.mrb[0].mxu0 %v312
        %v464 = vpop.f32.mrb[0].mxu0
        %v465 = vadd.f32 %v371, %v464
        %v466 = vpop.f32.mrb[0].mxu0
        %467 = vmatprep.mubr.f32.mxu0 %v315
        %468 = vmatmul.mubr.f32.gmra.mrb[0].mxu0 %v314
        %v469 = vpop.f32.mrb[0].mxu0
        %v470 = vadd.f32 %v371, %v469
        %v471 = vpop.f32.mrb[0].mxu0
        %472 = vmatprep.mubr.f32.mxu0 %v317
        %473 = vmatmul.mubr.f32.gmra.mrb[0].mxu0 %v316
        %v474 = vpop.f32.mrb[0].mxu0
        %v475 = vadd.f32 %v371, %v474
        %v476 = vpop.f32.mrb[0].mxu0
        %477 = vmatprep.mubr.f32.mxu0 %v319
        %478 = vmatmul.mubr.f32.gmra.mrb[0].mxu0 %v318
        %v479 = vpop.f32.mrb[0].mxu0
        %v480 = vadd.f32 %v371, %v479
        %v481 = vpop.f32.mrb[0].mxu0
        %482 = vmatprep.mubr.f32.mxu0 %v321
        %483 = vmatmul.mubr.f32.gmra.mrb[0].mxu0 %v320
        %v484 = vpop.f32.mrb[0].mxu0
        %v485 = vadd.f32 %v371, %v484
        %v486 = vpop.f32.mrb[0].mxu0
        %487 = vmatprep.mubr.f32.mxu0 %v323
        %488 = vmatmul.mubr.f32.gmra.mrb[0].mxu0 %v322
        %v489 = vpop.f32.mrb[0].mxu0
        %v490 = vadd.f32 %v371, %v489
        %v491 = vpop.f32.mrb[0].mxu0
        %492 = vmatprep.mubr.f32.mxu0 %v325
        %493 = vmatmul.mubr.f32.gmra.mrb[0].mxu0 %v324
        %v494 = vpop.f32.mrb[0].mxu0
        %v495 = vadd.f32 %v371, %v494
        %v496 = vpop.f32.mrb[0].mxu0
        %497 = vmatprep.mubr.f32.mxu0 %v327
        %498 = vmatmul.mubr.f32.gmra.mrb[0].mxu0 %v326
        %v499 = vpop.f32.mrb[0].mxu0
        %v500 = vadd.f32 %v371, %v499
        %v501 = vpop.f32.mrb[0].mxu0
        %502 = vmatprep.mubr.f32.mxu0 %v329
        %503 = vmatmul.mubr.f32.gmra.mrb[0].mxu0 %v328
        %v504 = vpop.f32.mrb[0].mxu0
        %v505 = vadd.f32 %v371, %v504
        %v506 = vpop.f32.mrb[0].mxu0
        %507 = vmatprep.mubr.f32.mxu0 %v331
        %508 = vmatmul.mubr.f32.gmra.mrb[0].mxu0 %v330
        %v509 = vpop.f32.mrb[0].mxu0
        %v510 = vadd.f32 %v371, %v509
        %v511 = vpop.f32.mrb[0].mxu0
        %512 = vmatprep.mubr.f32.mxu0 %v333
        %513 = vmatmul.mubr.f32.gmra.mrb[0].mxu0 %v332
        %v514 = vpop.f32.mrb[0].mxu0
        %v515 = vadd.f32 %v371, %v514
        %v516 = vpop.f32.mrb[0].mxu0
        %517 = vdwg.mxu0
        %v518 = vmax.f32 %v440, 0.0
        %v519 = vmax.f32 %v445, 0.0
        %v520 = vmax.f32 %v450, 0.0
        %v521 = vmax.f32 %v455, 0.0
        %v522 = vmax.f32 %v460, 0.0
        %v523 = vmax.f32 %v465, 0.0
        %v524 = vmax.f32 %v470, 0.0
        %v525 = vmax.f32 %v475, 0.0
        %v526 = vmax.f32 %v480, 0.0
        %v527 = vmax.f32 %v485, 0.0
        %v528 = vmax.f32 %v490, 0.0
        %v529 = vmax.f32 %v495, 0.0
        %v530 = vmax.f32 %v500, 0.0
        %v531 = vmax.f32 %v505, 0.0
        %v532 = vmax.f32 %v510, 0.0
        %v533 = vmax.f32 %v515, 0.0
        %v534 = vld [vmem:[%s3] sm:$0xff]
        %v535 = vld [vmem:[%s3 + $0x8] sm:$0xff]
        %v536 = vld [vmem:[%s3 + $0x10] sm:$0xff]
        %v537 = vld [vmem:[%s3 + $0x18] sm:$0xff]
        %v538 = vld [vmem:[%s3 + $0x20] sm:$0xff]
        %v539 = vld [vmem:[%s3 + $0x28] sm:$0xff]
        %v540 = vld [vmem:[%s3 + $0x30] sm:$0xff]
        %v541 = vld [vmem:[%s3 + $0x38] sm:$0xff]
        %v542 = vld [vmem:[%s3 + $0x40] sm:$0xff]
        %v543 = vld [vmem:[%s3 + $0x48] sm:$0xff]
        %v544 = vld [vmem:[%s3 + $0x50] sm:$0xff]
        %v545 = vld [vmem:[%s3 + $0x58] sm:$0xff]
        %v546 = vld [vmem:[%s3 + $0x60] sm:$0xff]
        %v547 = vld [vmem:[%s3 + $0x68] sm:$0xff]
        %v548 = vld [vmem:[%s3 + $0x70] sm:$0xff]
        %v549 = vld [vmem:[%s3 + $0x78] sm:$0xff]
        %v550 = vld [vmem:[%s4] sm:$0x1]
        %v552 = vlaneseq
        %v553 = vshrl.u32 %v552, 7
        %v554 = vsub.s32 0, %v553
        %v555 = vrot.slane %v550, %v554
        %557 = vmatprep.subr.mxu0 0.0
        %558 = vmatpush1.msra.mxu0 %v534
        %559 = vmatprep.subr.mxu0 0.0
        %560 = vmatpush1.msra.mxu0 %v535
        %561 = vmatprep.subr.mxu0 0.0
        %562 = vmatpush1.msra.mxu0 %v536
        %563 = vmatprep.subr.mxu0 0.0
        %564 = vmatpush1.msra.mxu0 %v537
        %565 = vmatprep.subr.mxu0 0.0
        %566 = vmatpush1.msra.mxu0 %v538
        %567 = vmatprep.subr.mxu0 0.0
        %568 = vmatpush1.msra.mxu0 %v539
        %569 = vmatprep.subr.mxu0 0.0
        %570 = vmatpush1.msra.mxu0 %v540
        %571 = vmatprep.subr.mxu0 0.0
        %572 = vmatpush1.msra.mxu0 %v541
        %573 = vmatprep.subr.mxu0 0.0
        %574 = vmatpush1.msra.mxu0 %v542
        %575 = vmatprep.subr.mxu0 0.0
        %576 = vmatpush1.msra.mxu0 %v543
        %577 = vmatprep.subr.mxu0 0.0
        %578 = vmatpush1.msra.mxu0 %v544
        %579 = vmatprep.subr.mxu0 0.0
        %580 = vmatpush1.msra.mxu0 %v545
        %581 = vmatprep.subr.mxu0 0.0
        %582 = vmatpush1.msra.mxu0 %v546
        %583 = vmatprep.subr.mxu0 0.0
        %584 = vmatpush1.msra.mxu0 %v547
        %585 = vmatprep.subr.mxu0 0.0
        %586 = vmatpush1.msra.mxu0 %v548
        %587 = vmatprep.subr.mxu0 0.0
        %588 = vmatpush1.msra.mxu0 %v549
        %589 = vmatprep.subr.mxu0 0.0
        %590 = vmatpush1.msra.mxu0 0.0
        %591 = vmatprep.subr.mxu0 0.0
        %592 = vmatpush1.msra.mxu0 0.0
        %593 = vmatprep.subr.mxu0 0.0
        %594 = vmatpush1.msra.mxu0 0.0
        %595 = vmatprep.subr.mxu0 0.0
        %596 = vmatpush1.msra.mxu0 0.0
        %597 = vmatprep.subr.mxu0 0.0
        %598 = vmatpush1.msra.mxu0 0.0
        %599 = vmatprep.subr.mxu0 0.0
        %600 = vmatpush1.msra.mxu0 0.0
        %601 = vmatprep.subr.mxu0 0.0
        %602 = vmatpush1.msra.mxu0 0.0
        %603 = vmatprep.subr.mxu0 0.0
        %604 = vmatpush1.msra.mxu0 0.0
        %605 = vmatprep.subr.mxu0 0.0
        %606 = vmatpush1.msra.mxu0 0.0
        %607 = vmatprep.subr.mxu0 0.0
        %608 = vmatpush1.msra.mxu0 0.0
        %609 = vmatprep.subr.mxu0 0.0
        %610 = vmatpush1.msra.mxu0 0.0
        %611 = vmatprep.subr.mxu0 0.0
        %612 = vmatpush1.msra.mxu0 0.0
        %613 = vmatprep.subr.mxu0 0.0
        %614 = vmatpush1.msra.mxu0 0.0
        %615 = vmatprep.subr.mxu0 0.0
        %616 = vmatpush1.msra.mxu0 0.0
        %617 = vmatprep.subr.mxu0 0.0
        %618 = vmatpush1.msra.mxu0 0.0
        %619 = vmatprep.subr.mxu0 0.0
        %620 = vmatpush1.msra.mxu0 0.0
        %621 = vmatprep.mubr.f32.mxu0 0.0
        %622 = vmatmul.mubr.f32.gmra.mrb[0].mxu0 %v518
        %v623 = vpop.f32.mrb[0].mxu0
        %v624 = vadd.f32 %v555, %v623
        %v625 = vpop.f32.mrb[0].mxu0
        %626 = vmatprep.mubr.f32.mxu0 0.0
        %627 = vmatmul.mubr.f32.gmra.mrb[0].mxu0 %v519
        %v628 = vpop.f32.mrb[0].mxu0
        %v629 = vadd.f32 %v555, %v628
        %v630 = vpop.f32.mrb[0].mxu0
        %631 = vmatprep.mubr.f32.mxu0 0.0
        %632 = vmatmul.mubr.f32.gmra.mrb[0].mxu0 %v520
        %v633 = vpop.f32.mrb[0].mxu0
        %v634 = vadd.f32 %v555, %v633
        %v635 = vpop.f32.mrb[0].mxu0
        %636 = vmatprep.mubr.f32.mxu0 0.0
        %637 = vmatmul.mubr.f32.gmra.mrb[0].mxu0 %v521
        %v638 = vpop.f32.mrb[0].mxu0
        %v639 = vadd.f32 %v555, %v638
        %v640 = vpop.f32.mrb[0].mxu0
        %641 = vmatprep.mubr.f32.mxu0 0.0
        %642 = vmatmul.mubr.f32.gmra.mrb[0].mxu0 %v522
        %v643 = vpop.f32.mrb[0].mxu0
        %v644 = vadd.f32 %v555, %v643
        %v645 = vpop.f32.mrb[0].mxu0
        %646 = vmatprep.mubr.f32.mxu0 0.0
        %647 = vmatmul.mubr.f32.gmra.mrb[0].mxu0 %v523
        %v648 = vpop.f32.mrb[0].mxu0
        %v649 = vadd.f32 %v555, %v648
        %v650 = vpop.f32.mrb[0].mxu0
        %651 = vmatprep.mubr.f32.mxu0 0.0
        %652 = vmatmul.mubr.f32.gmra.mrb[0].mxu0 %v524
        %v653 = vpop.f32.mrb[0].mxu0
        %v654 = vadd.f32 %v555, %v653
        %v655 = vpop.f32.mrb[0].mxu0
        %656 = vmatprep.mubr.f32.mxu0 0.0
        %657 = vmatmul.mubr.f32.gmra.mrb[0].mxu0 %v525
        %v658 = vpop.f32.mrb[0].mxu0
        %v659 = vadd.f32 %v555, %v658
        %v660 = vpop.f32.mrb[0].mxu0
        %661 = vmatprep.mubr.f32.mxu0 0.0
        %662 = vmatmul.mubr.f32.gmra.mrb[0].mxu0 %v526
        %v663 = vpop.f32.mrb[0].mxu0
        %v664 = vadd.f32 %v555, %v663
        %v665 = vpop.f32.mrb[0].mxu0
        %666 = vmatprep.mubr.f32.mxu0 0.0
        %667 = vmatmul.mubr.f32.gmra.mrb[0].mxu0 %v527
        %v668 = vpop.f32.mrb[0].mxu0
        %v669 = vadd.f32 %v555, %v668
        %v670 = vpop.f32.mrb[0].mxu0
        %671 = vmatprep.mubr.f32.mxu0 0.0
        %672 = vmatmul.mubr.f32.gmra.mrb[0].mxu0 %v528
        %v673 = vpop.f32.mrb[0].mxu0
        %v674 = vadd.f32 %v555, %v673
        %v675 = vpop.f32.mrb[0].mxu0
        %676 = vmatprep.mubr.f32.mxu0 0.0
        %677 = vmatmul.mubr.f32.gmra.mrb[0].mxu0 %v529
        %v678 = vpop.f32.mrb[0].mxu0
        %v679 = vadd.f32 %v555, %v678
        %v680 = vpop.f32.mrb[0].mxu0
        %681 = vmatprep.mubr.f32.mxu0 0.0
        %682 = vmatmul.mubr.f32.gmra.mrb[0].mxu0 %v530
        %v683 = vpop.f32.mrb[0].mxu0
        %v684 = vadd.f32 %v555, %v683
        %v685 = vpop.f32.mrb[0].mxu0
        %686 = vmatprep.mubr.f32.mxu0 0.0
        %687 = vmatmul.mubr.f32.gmra.mrb[0].mxu0 %v531
        %v688 = vpop.f32.mrb[0].mxu0
        %v689 = vadd.f32 %v555, %v688
        %v690 = vpop.f32.mrb[0].mxu0
        %691 = vmatprep.mubr.f32.mxu0 0.0
        %692 = vmatmul.mubr.f32.gmra.mrb[0].mxu0 %v532
        %v693 = vpop.f32.mrb[0].mxu0
        %v694 = vadd.f32 %v555, %v693
        %v695 = vpop.f32.mrb[0].mxu0
        %696 = vmatprep.mubr.f32.mxu0 0.0
        %697 = vmatmul.mubr.f32.gmra.mrb[0].mxu0 %v533
        %v698 = vpop.f32.mrb[0].mxu0
        %v699 = vadd.f32 %v555, %v698
        %v700 = vpop.f32.mrb[0].mxu0
        %701 = vdwg.mxu0
        %v702 = vmax.f32 %v624, 0.0
        %v703 = vmax.f32 %v629, 0.0
        %v704 = vmax.f32 %v634, 0.0
        %v705 = vmax.f32 %v639, 0.0
        %v706 = vmax.f32 %v644, 0.0
        %v707 = vmax.f32 %v649, 0.0
        %v708 = vmax.f32 %v654, 0.0
        %v709 = vmax.f32 %v659, 0.0
        %v710 = vmax.f32 %v664, 0.0
        %v711 = vmax.f32 %v669, 0.0
        %v712 = vmax.f32 %v674, 0.0
        %v713 = vmax.f32 %v679, 0.0
        %v714 = vmax.f32 %v684, 0.0
        %v715 = vmax.f32 %v689, 0.0
        %v716 = vmax.f32 %v694, 0.0
        %v717 = vmax.f32 %v699, 0.0
        %v718 = vld [vmem:[%s5] sm:$0xff]
        %v719 = vld [vmem:[%s5 + $0x8] sm:$0xff]
        %v720 = vld [vmem:[%s5 + $0x10] sm:$0xff]
        %v721 = vld [vmem:[%s5 + $0x18] sm:$0xff]
        %v722 = vld [vmem:[%s5 + $0x20] sm:$0xff]
        %v723 = vld [vmem:[%s5 + $0x28] sm:$0xff]
        %v724 = vld [vmem:[%s5 + $0x30] sm:$0xff]
        %v725 = vld [vmem:[%s5 + $0x38] sm:$0xff]
        %v726 = vld [vmem:[%s6] sm:$0x1]
        %v728 = vlaneseq
        %v729 = vshrl.u32 %v728, 7
        %v730 = vsub.s32 0, %v729
        %v731 = vrot.slane %v726, %v730
        %vm733 = vcmask 523264
        %v735 = vsel %vm733, %v702, 0
        %v738 = vsel %vm733, %v703, 0
        %v741 = vsel %vm733, %v704, 0
        %v744 = vsel %vm733, %v705, 0
        %v747 = vsel %vm733, %v706, 0
        %v750 = vsel %vm733, %v707, 0
        %v753 = vsel %vm733, %v708, 0
        %v756 = vsel %vm733, %v709, 0
        %v759 = vsel %vm733, %v710, 0
        %v762 = vsel %vm733, %v711, 0
        %v765 = vsel %vm733, %v712, 0
        %v768 = vsel %vm733, %v713, 0
        %v771 = vsel %vm733, %v714, 0
        %v774 = vsel %vm733, %v715, 0
        %v777 = vsel %vm733, %v716, 0
        %v780 = vsel %vm733, %v717, 0
        %782 = vmatprep.subr.mxu0 0.0
        %783 = vmatpush1.msra.mxu0 %v718
        %784 = vmatprep.subr.mxu0 0.0
        %785 = vmatpush1.msra.mxu0 %v719
        %786 = vmatprep.subr.mxu0 0.0
        %787 = vmatpush1.msra.mxu0 %v720
        %788 = vmatprep.subr.mxu0 0.0
        %789 = vmatpush1.msra.mxu0 %v721
        %790 = vmatprep.subr.mxu0 0.0
        %791 = vmatpush1.msra.mxu0 %v722
        %792 = vmatprep.subr.mxu0 0.0
        %793 = vmatpush1.msra.mxu0 %v723
        %794 = vmatprep.subr.mxu0 0.0
        %795 = vmatpush1.msra.mxu0 %v724
        %796 = vmatprep.subr.mxu0 0.0
        %797 = vmatpush1.msra.mxu0 %v725
        %798 = vmatprep.subr.mxu0 0.0
        %799 = vmatpush1.msra.mxu0 0.0
        %800 = vmatprep.subr.mxu0 0.0
        %801 = vmatpush1.msra.mxu0 0.0
        %802 = vmatprep.subr.mxu0 0.0
        %803 = vmatpush1.msra.mxu0 0.0
        %804 = vmatprep.subr.mxu0 0.0
        %805 = vmatpush1.msra.mxu0 0.0
        %806 = vmatprep.subr.mxu0 0.0
        %807 = vmatpush1.msra.mxu0 0.0
        %808 = vmatprep.subr.mxu0 0.0
        %809 = vmatpush1.msra.mxu0 0.0
        %810 = vmatprep.subr.mxu0 0.0
        %811 = vmatpush1.msra.mxu0 0.0
        %812 = vmatprep.subr.mxu0 0.0
        %813 = vmatpush1.msra.mxu0 0.0
        %814 = vmatprep.subr.mxu0 0.0
        %815 = vmatpush1.msra.mxu0 0.0
        %816 = vmatprep.subr.mxu0 0.0
        %817 = vmatpush1.msra.mxu0 0.0
        %818 = vmatprep.subr.mxu0 0.0
        %819 = vmatpush1.msra.mxu0 0.0
        %820 = vmatprep.subr.mxu0 0.0
        %821 = vmatpush1.msra.mxu0 0.0
        %822 = vmatprep.subr.mxu0 0.0
        %823 = vmatpush1.msra.mxu0 0.0
        %824 = vmatprep.subr.mxu0 0.0
        %825 = vmatpush1.msra.mxu0 0.0
        %826 = vmatprep.subr.mxu0 0.0
        %827 = vmatpush1.msra.mxu0 0.0
        %828 = vmatprep.subr.mxu0 0.0
        %829 = vmatpush1.msra.mxu0 0.0
        %830 = vmatprep.subr.mxu0 0.0
        %831 = vmatpush1.msra.mxu0 0.0
        %832 = vmatprep.subr.mxu0 0.0
        %833 = vmatpush1.msra.mxu0 0.0
        %834 = vmatprep.subr.mxu0 0.0
        %835 = vmatpush1.msra.mxu0 0.0
        %836 = vmatprep.subr.mxu0 0.0
        %837 = vmatpush1.msra.mxu0 0.0
        %838 = vmatprep.subr.mxu0 0.0
        %839 = vmatpush1.msra.mxu0 0.0
        %840 = vmatprep.subr.mxu0 0.0
        %841 = vmatpush1.msra.mxu0 0.0
        %842 = vmatprep.subr.mxu0 0.0
        %843 = vmatpush1.msra.mxu0 0.0
        %844 = vmatprep.subr.mxu0 0.0
        %845 = vmatpush1.msra.mxu0 0.0
        %846 = vmatprep.mubr.f32.mxu0 0.0
        %847 = vmatmul.mubr.f32.gmra.mrb[0].mxu0 %v735
        %v848 = vpop.f32.mrb[0].mxu0
        %v849 = vadd.f32 %v731, %v848
        %v850 = vpop.f32.mrb[0].mxu0
        %851 = vmatprep.mubr.f32.mxu0 0.0
        %852 = vmatmul.mubr.f32.gmra.mrb[0].mxu0 %v738
        %v853 = vpop.f32.mrb[0].mxu0
        %v854 = vadd.f32 %v731, %v853
        %v855 = vpop.f32.mrb[0].mxu0
        %856 = vmatprep.mubr.f32.mxu0 0.0
        %857 = vmatmul.mubr.f32.gmra.mrb[0].mxu0 %v741
        %v858 = vpop.f32.mrb[0].mxu0
        %v859 = vadd.f32 %v731, %v858
        %v860 = vpop.f32.mrb[0].mxu0
        %861 = vmatprep.mubr.f32.mxu0 0.0
        %862 = vmatmul.mubr.f32.gmra.mrb[0].mxu0 %v744
        %v863 = vpop.f32.mrb[0].mxu0
        %v864 = vadd.f32 %v731, %v863
        %v865 = vpop.f32.mrb[0].mxu0
        %866 = vmatprep.mubr.f32.mxu0 0.0
        %867 = vmatmul.mubr.f32.gmra.mrb[0].mxu0 %v747
        %v868 = vpop.f32.mrb[0].mxu0
        %v869 = vadd.f32 %v731, %v868
        %v870 = vpop.f32.mrb[0].mxu0
        %871 = vmatprep.mubr.f32.mxu0 0.0
        %872 = vmatmul.mubr.f32.gmra.mrb[0].mxu0 %v750
        %v873 = vpop.f32.mrb[0].mxu0
        %v874 = vadd.f32 %v731, %v873
        %v875 = vpop.f32.mrb[0].mxu0
        %876 = vmatprep.mubr.f32.mxu0 0.0
        %877 = vmatmul.mubr.f32.gmra.mrb[0].mxu0 %v753
        %v878 = vpop.f32.mrb[0].mxu0
        %v879 = vadd.f32 %v731, %v878
        %v880 = vpop.f32.mrb[0].mxu0
        %881 = vmatprep.mubr.f32.mxu0 0.0
        %882 = vmatmul.mubr.f32.gmra.mrb[0].mxu0 %v756
        %v883 = vpop.f32.mrb[0].mxu0
        %v884 = vadd.f32 %v731, %v883
        %v885 = vpop.f32.mrb[0].mxu0
        %886 = vmatprep.mubr.f32.mxu0 0.0
        %887 = vmatmul.mubr.f32.gmra.mrb[0].mxu0 %v759
        %v888 = vpop.f32.mrb[0].mxu0
        %v889 = vadd.f32 %v731, %v888
        %v890 = vpop.f32.mrb[0].mxu0
        %891 = vmatprep.mubr.f32.mxu0 0.0
        %892 = vmatmul.mubr.f32.gmra.mrb[0].mxu0 %v762
        %v893 = vpop.f32.mrb[0].mxu0
        %v894 = vadd.f32 %v731, %v893
        %v895 = vpop.f32.mrb[0].mxu0
        %896 = vmatprep.mubr.f32.mxu0 0.0
        %897 = vmatmul.mubr.f32.gmra.mrb[0].mxu0 %v765
        %v898 = vpop.f32.mrb[0].mxu0
        %v899 = vadd.f32 %v731, %v898
        %v900 = vpop.f32.mrb[0].mxu0
        %901 = vmatprep.mubr.f32.mxu0 0.0
        %902 = vmatmul.mubr.f32.gmra.mrb[0].mxu0 %v768
        %v903 = vpop.f32.mrb[0].mxu0
        %v904 = vadd.f32 %v731, %v903
        %v905 = vpop.f32.mrb[0].mxu0
        %906 = vmatprep.mubr.f32.mxu0 0.0
        %907 = vmatmul.mubr.f32.gmra.mrb[0].mxu0 %v771
        %v908 = vpop.f32.mrb[0].mxu0
        %v909 = vadd.f32 %v731, %v908
        %v910 = vpop.f32.mrb[0].mxu0
        %911 = vmatprep.mubr.f32.mxu0 0.0
        %912 = vmatmul.mubr.f32.gmra.mrb[0].mxu0 %v774
        %v913 = vpop.f32.mrb[0].mxu0
        %v914 = vadd.f32 %v731, %v913
        %v915 = vpop.f32.mrb[0].mxu0
        %916 = vmatprep.mubr.f32.mxu0 0.0
        %917 = vmatmul.mubr.f32.gmra.mrb[0].mxu0 %v777
        %v918 = vpop.f32.mrb[0].mxu0
        %v919 = vadd.f32 %v731, %v918
        %v920 = vpop.f32.mrb[0].mxu0
        %921 = vmatprep.mubr.f32.mxu0 0.0
        %922 = vmatmul.mubr.f32.gmra.mrb[0].mxu0 %v780
        %v923 = vpop.f32.mrb[0].mxu0
        %v924 = vadd.f32 %v731, %v923
        %v925 = vpop.f32.mrb[0].mxu0
        %926 = vdwg.mxu0
        %vm927 = vcmask 64512
        %928 = vst.msk [vmem:[%s300] sm:$0xff] %vm927, %v849
        %929 = vst.msk [vmem:[%s300 + $0x8] sm:$0xff] %vm927, %v854
        %930 = vst.msk [vmem:[%s300 + $0x10] sm:$0xff] %vm927, %v859
        %931 = vst.msk [vmem:[%s300 + $0x18] sm:$0xff] %vm927, %v864
        %932 = vst.msk [vmem:[%s300 + $0x20] sm:$0xff] %vm927, %v869
        %933 = vst.msk [vmem:[%s300 + $0x28] sm:$0xff] %vm927, %v874
        %934 = vst.msk [vmem:[%s300 + $0x30] sm:$0xff] %vm927, %v879
        %935 = vst.msk [vmem:[%s300 + $0x38] sm:$0xff] %vm927, %v884
        %936 = vst.msk [vmem:[%s300 + $0x40] sm:$0xff] %vm927, %v889
        %937 = vst.msk [vmem:[%s300 + $0x48] sm:$0xff] %vm927, %v894
        %938 = vst.msk [vmem:[%s300 + $0x50] sm:$0xff] %vm927, %v899
        %939 = vst.msk [vmem:[%s300 + $0x58] sm:$0xff] %vm927, %v904
        %940 = vst.msk [vmem:[%s300 + $0x60] sm:$0xff] %vm927, %v909
        %941 = vst.msk [vmem:[%s300 + $0x68] sm:$0xff] %vm927, %v914
        %942 = vst.msk [vmem:[%s300 + $0x70] sm:$0xff] %vm927, %v919
        %943 = vst.msk [vmem:[%s300 + $0x78] sm:$0xff] %vm927, %v924
        %s944 = smul.u32 16, %s21
        %p945 = scmp.lt.s32.totalorder %s944, 31
        %s946 = scalar_select %p945, %s944, 31
        %s947 = smul.addr %s946, 8
        %s948 = scalar_lea.vmem %s7, %s947
        // Predicated region
        $region53: #{tpu_custom_call.1} parent=47 // pred_check
          %p949 = pneg %p191
        $region54: #{tpu_custom_call.1} parent=47 // pred_check_branch
          %951 = sbr.rel (%p949) target = $region56
        $region55: #{tpu_custom_call.1} parent=47 // pred_region
          %s952 = smul.u32 16, %s21
        $region56: #{tpu_custom_call.1} parent=47 // pred_fallthru
          _
      $region48: #{tpu_custom_call.1} parent=5 // pred_fallthru
        _
      %p953 = scmp.le.s32.totalorder 2, %s16
      // Predicated region
      $region57: #{tpu_custom_call.1} parent=5 // pred_check
        %p954 = pneg %p953
      $region58: #{tpu_custom_call.1} parent=5 // pred_check_branch
        %956 = sbr.rel (%p954) target = $region60
      $region59: #{tpu_custom_call.1} parent=5 // pred_region
        %s957 = ssub.s32 %s16, 2
        // Predicated region
        $region61: #{tpu_custom_call.1} parent=59 // pred_check
          %p958 = pneg %p197
        $region62: #{tpu_custom_call.1} parent=59 // pred_check_branch
          %960 = sbr.rel (%p958) target = $region64
        $region63: #{tpu_custom_call.1} parent=59 // pred_region
          %s961 = smul.u32 16, %s22
          %p962 = scmp.lt.s32.totalorder %s961, 31
          %s963 = scalar_select %p962, %s961, 31
          %s964 = smul.addr %s963, 8
          %s965 = scalar_lea.vmem %s7, %s964
        $region64: #{tpu_custom_call.1} parent=59 // pred_fallthru
          _
      $region60: #{tpu_custom_call.1} parent=5 // pred_fallthru
        _
    $region6: #{tpu_custom_call.1} parent=1 // loop_footer
      %s20 = sadd.s32 1, %s16
    $region7: #{tpu_custom_call.1} parent=1 // loop_footer_branch
      %15 = sbr.rel target = $region3
    $region8: #{tpu_custom_call.1} parent=1 // loop_exit
      _
    %966 = vsyncpa [#allocation3], 1
    %s967 = scalar_lea.sflag [#allocation3], 1
    %968 = vsyncpa %s967, 1

</llo_original>
